<compile_context>
chip_gen: v7x
topology: tpu7x:2x2x1
jax: 0.10.0
libtpu: 0.0.40
codegen_flags: <defaults>
</compile_context>

<pallas_src>
import functools
import math

import jax
import jax.numpy as jnp
from jax.experimental import pallas as pl
from jax.experimental.pallas import tpu as pltpu

_SHIFT = math.log(2.0)
_MAX_LANE_COLS = 8192  # cap on the merged lane-dense column width


def _round_up(x, m):
    return (x + m - 1) // m * m


def _make_kernel(compute_dtype):
    def kernel(x_ref, o_ref):
        x = x_ref[...].astype(compute_dtype)
        # Numerically stable softplus (matches torch F.softplus, beta=1):
        #   softplus(x) = max(x, 0) + log1p(exp(-|x|))
        sp = jnp.maximum(x, 0.0) + jnp.log1p(jnp.exp(-jnp.abs(x)))
        o_ref[...] = (sp - _SHIFT).astype(o_ref.dtype)

    return kernel


@functools.lru_cache(maxsize=1)
def _chip_profile():
    """(target_block_bytes, vmem_limit_bytes, multi_tc, bf16_compute_ok)."""
    kind = ""
    try:
        kind = jax.devices()[0].device_kind.lower()
    except Exception:  # pragma: no cover - CPU/interpret fallback
        pass
    is_v7 = "v7" in kind
    is_v6 = "v6" in kind
    # Chips exposing 2 TensorCores per device (megacore / dual-TC).
    multi_tc = is_v7 or ("v4" in kind) or ("v5p" in kind)
    # Native bf16 VPU/EUP: v6e / v7x only (v5e would emulate bf16 math).
    bf16_ok = is_v6 or is_v7
    if is_v7:
        # 2 x (8 + 8) MiB live double-buffered = 32 MiB, fits 64 MiB physical.
        return 8 << 20, 48 << 20, multi_tc, bf16_ok
    return 4 << 20, 32 << 20, multi_tc, bf16_ok


def _lane_dense_cols(n):
    """Largest C = 128*k dividing n (requires n % 128 == 0), preferring >= 8 rows."""
    m = n // 128
    best_any, best_r8 = 128, None
    for k in range(1, min(m, _MAX_LANE_COLS // 128) + 1):
        if m % k == 0:
            c = 128 * k
            best_any = c
            if n // c >= 8:
                best_r8 = c
    return best_r8 if best_r8 is not None else best_any


def _choose_tiles(rows, cols, itemsize, target_bytes, multi_tc):
    """Pick (tr, tc) honoring the (8,128) block constraint without padding."""
    # Sub-32-bit dtypes pack along sublanes (8 f32 / 16 bf16 / 32 int8 rows).
    sub = max(8, 32 // max(itemsize, 1))

    # Tile columns only when one `sub`-row stripe of the full width already
    # exceeds the byte budget (very wide fallback inputs).
    if cols > 128 and sub * cols * itemsize > target_bytes:
        tc = max(128, (target_bytes // (sub * itemsize)) // 128 * 128)
        tc = min(tc, _round_up(cols, 128))
    else:
        tc = cols  # full extent -> exempt from the 128-multiple constraint

    row_bytes = max(tc * itemsize, 1)
    tr = max(sub, (target_bytes // row_bytes) // sub * sub)

    if tr >= rows:
        tr = rows  # full extent -> exempt from the 8-multiple constraint
        # Dual-TC chips only: split a large single block so both cores work.
        if (multi_tc and tc == cols and rows >= 2 * sub
                and rows * cols * itemsize > (1 << 20)):
            tr = _round_up(pl.cdiv(rows, 2), sub)
    elif multi_tc:
        # Few, ragged row blocks: rebalance to an even number of near-equal
        # blocks so the two TensorCores finish together.
        nb = pl.cdiv(rows, tr)
        if nb <= 4:
            nb = _round_up(nb, 2)
            tr = max(sub, _round_up(pl.cdiv(rows, nb), sub))
    return tr, tc


def shifted_softplus(x):
    """Applies softplus(x) - log(2) elementwise via a Pallas TPU kernel."""
    orig_shape = x.shape
    orig_dtype = x.dtype

    if not jnp.issubdtype(orig_dtype, jnp.floating):
        raise TypeError("shifted_softplus expects a floating-point input")
    if x.size == 0:
        return x

    target_bytes, vmem_limit, multi_tc, bf16_ok = _chip_profile()

    n = x.size
    if n % 128 == 0:
        # Lane-dense view: merge all dims into (rows, C) with C a wide multiple
        # of 128 so every vreg lane / DMA store is dense (free for contiguous
        # arrays — just a reshape).
        cols = _lane_dense_cols(n)
        rows = n // cols
    elif x.ndim >= 2:
        cols = orig_shape[-1]
        rows = n // cols
    else:
        rows, cols = 1, n
    x2d = x.reshape(rows, cols)

    itemsize = jnp.dtype(orig_dtype).itemsize
    tr, tc = _choose_tiles(rows, cols, itemsize, target_bytes, multi_tc)
    grid = (pl.cdiv(rows, tr), pl.cdiv(cols, tc))

    # bf16 math is native on v6e/v7x; v5e (no bf16 VPU/EUP) keeps f32.
    if orig_dtype == jnp.bfloat16 and bf16_ok:
        compute_dtype = jnp.bfloat16
    else:
        compute_dtype = jnp.float32

    out2d = pl.pallas_call(
        _make_kernel(compute_dtype),
        out_shape=jax.ShapeDtypeStruct((rows, cols), orig_dtype),
        grid_spec=pltpu.PrefetchScalarGridSpec(
            num_scalar_prefetch=0,
            grid=grid,
            in_specs=[pl.BlockSpec((tr, tc), lambda i, j: (i, j))],
            out_specs=pl.BlockSpec((tr, tc), lambda i, j: (i, j)),
        ),
        compiler_params=pltpu.CompilerParams(
            dimension_semantics=("parallel", "parallel"),
            vmem_limit_bytes=vmem_limit,
        ),
    )(x2d)

    return out2d.reshape(orig_shape)


if __name__ == "__main__":
    key = jax.random.PRNGKey(0)
    k1, k2, k3, k4, k5 = jax.random.split(key, 5)

    def ref_fn(v):
        return jax.nn.softplus(v.astype(jnp.float32)) - _SHIFT

    # (num_nodes, hidden_channels): aligned SchNet hidden activations.
    x1 = jax.random.normal(k1, (16, 128), dtype=jnp.float32) * 3.0
    o1 = jax.block_until_ready(shifted_softplus(x1))
    assert o1.shape == x1.shape and o1.dtype == x1.dtype
    assert jnp.allclose(o1, ref_fn(x1), atol=1e-5, rtol=1e-5)

    # Narrow last dim (SchNet output head uses hidden // 2 = 64): exercises
    # the lane-dense merged flattening, (16, 64) -> (8, 128) internally.
    x2 = jax.random.normal(k2, (16, 64), dtype=jnp.float32) * 3.0
    o2 = jax.block_until_ready(shifted_softplus(x2))
    assert o2.shape == x2.shape
    assert jnp.allclose(o2, ref_fn(x2), atol=1e-5, rtol=1e-5)

    # Unaligned shape: no-pad partial-block fallback path.
    x3 = jax.random.normal(k3, (7, 100), dtype=jnp.float32) * 3.0
    o3 = jax.block_until_ready(shifted_softplus(x3))
    assert o3.shape == x3.shape
    assert jnp.allclose(o3, ref_fn(x3), atol=1e-5, rtol=1e-5)

    # 1-D input: reshaped to a dense 2-D slab, (1024,) -> (8, 128).
    x4 = jax.random.normal(k4, (1024,), dtype=jnp.float32) * 3.0
    o4 = jax.block_until_ready(shifted_softplus(x4))
    assert o4.shape == x4.shape
    assert jnp.allclose(o4, ref_fn(x4), atol=1e-5, rtol=1e-5)

    # bf16 input: native bf16 in-kernel math on v6e/v7x, f32 upcast on v5e.
    x5 = (jax.random.normal(k5, (16, 64), dtype=jnp.float32) * 3.0).astype(jnp.bfloat16)
    o5 = jax.block_until_ready(shifted_softplus(x5))
    assert o5.shape == x5.shape and o5.dtype == jnp.bfloat16
    assert jnp.allclose(o5.astype(jnp.float32), ref_fn(x5), atol=2e-2, rtol=2e-2)

    print("KERNEL_OK")
</pallas_src>

<mosaic_0001>
module attributes {stable_mosaic.version = 11 : i64} {
  func.func @kernel(%arg0: i32, %arg1: i32, %arg2: memref<8x256xf32, #tpu.memory_space<vmem>>, %arg3: memref<8x256xf32, #tpu.memory_space<vmem>>) attributes {dimension_semantics = [#tpu.dimension_semantics<parallel>, #tpu.dimension_semantics<parallel>], iteration_bounds = array<i64: 1, 1>, scalar_prefetch = 0 : i64, scratch_operands = 0 : i64, tpu.core_type = #tpu.core_type<tc>, window_params = [{transform_indices = @transform_0, window_bounds = array<i64: 8, 256>}, {transform_indices = @transform_1, window_bounds = array<i64: 8, 256>}]} {
    %c0 = arith.constant 0 : index
    %c0_0 = arith.constant 0 : index
    %0 = vector.load %arg2[%c0, %c0_0] : memref<8x256xf32, #tpu.memory_space<vmem>>, vector<8x256xf32>
    %cst = arith.constant 0.000000e+00 : f32
    %1 = vector.broadcast %cst : f32 to vector<8x256xf32>
    %2 = arith.maximumf %0, %1 : vector<8x256xf32>
    %3 = math.absf %0 : vector<8x256xf32>
    %cst_1 = arith.constant 0.000000e+00 : f32
    %4 = vector.broadcast %cst_1 : f32 to vector<8x256xf32>
    %5 = arith.subf %4, %3 : vector<8x256xf32>
    %6 = math.exp %5 : vector<8x256xf32>
    %7 = math.log1p %6 : vector<8x256xf32>
    %8 = arith.addf %2, %7 : vector<8x256xf32>
    %cst_2 = arith.constant 0.693147182 : f32
    %9 = vector.broadcast %cst_2 : f32 to vector<8x256xf32>
    %10 = arith.subf %8, %9 : vector<8x256xf32>
    %c0_3 = arith.constant 0 : index
    %c0_4 = arith.constant 0 : index
    %11 = vector.load %arg3[%c0_3, %c0_4] : memref<8x256xf32, #tpu.memory_space<vmem>>, vector<8x256xf32>
    tpu.vector_store %arg3[%c0_3, %c0_4], %10 {strides = array<i32>} : memref<8x256xf32, #tpu.memory_space<vmem>>, vector<8x256xf32>,
    return
  }
  func.func @transform_0(%arg0: i32, %arg1: i32) -> (i32, i32) {
    %c0_i32 = arith.constant 0 : i32
    return %arg0, %arg1 : i32, i32
  }
  func.func @transform_1(%arg0: i32, %arg1: i32) -> (i32, i32) {
    %c0_i32 = arith.constant 0 : i32
    return %arg0, %arg1 : i32, i32
  }
}

</mosaic_0001>

<llo_original>
// kernel: tpu_custom_call.1
$region0: #{tpu_custom_call.1}
  #allocation0 [shape = 'u32[]', space=smem, size = 0x4, offset = 0x4, fixed_abs, tag = 'smem constant byte address 0x4 - core index']
  #allocation1 [shape = 'u32[144,128]{1,0:T(1,128)}', space=vmem, size = 0x12000, scoped, tag = 'internal scratch']
  %s0 = inlined_call_operand.hbm [shape: f32[8,256], index: 0, kind: input, shape index: {}]
  %s1 = inlined_call_operand.hbm [shape: f32[8,256], index: 1, kind: output, shape index: {}]
  %s2 = sld [smem:[#allocation0]]
  $region18: #{tpu_custom_call.1} parent=0
    _
  %s4 = ssub.s32 1, %s2
  %s5 = scalar_select 0, %s4, %s2
  $region1: #{tpu_custom_call.1} parent=0
    #allocation2 [shape = 'u8[8192]{0}', space=vmem, size = 0x2000, scoped, tag = 'input window, operand 0, single buffered']
    #allocation3 [shape = 's32[1]{0}', space=sflag, size = 0x4, scoped, tag = 'scoped memory for tpu_custom_call.1']
    #allocation4 [shape = 's32[1]{0}', space=sflag, size = 0x4, scoped, tag = 'scoped memory for tpu_custom_call.1']
    #allocation5 [shape = 'u8[8192]{0}', space=vmem, size = 0x2000, scoped, tag = 'output window, operand 0, single buffered']
    %6 = vsyncpa [#allocation3], 0
    %7 = vsyncpa [#allocation4], 0
    // Predicated region
    $region2: #{tpu_custom_call.1} parent=1 // pred_check
      _
    $region3: #{tpu_custom_call.1} parent=1 // pred_check_branch
      %9 = sbr.rel (0) target = $region5
    $region4: #{tpu_custom_call.1} parent=1 // pred_region
      %s11 = ssub.s32 256, 256
      %12 = vsyncadd [#allocation3], %s11
      %s14 = sshll.u32 [#allocation2], 4
      %s15 = int_to_ptr.vmem [resolvable:$true] %s14
      %17 = dma.hbm_to_vmem [thread:$0]  %s0, 256, %s15, [#allocation3]
    $region5: #{tpu_custom_call.1} parent=1 // pred_fallthru
      _
    // Predicated region
    $region6: #{tpu_custom_call.1} parent=1 // pred_check
      _
    $region7: #{tpu_custom_call.1} parent=1 // pred_check_branch
      %19 = sbr.rel (0) target = $region9
    $region8: #{tpu_custom_call.1} parent=1 // pred_region
      %20 = dma.done [#allocation3], 256
    $region9: #{tpu_custom_call.1} parent=1 // pred_fallthru
      _
    %v21 = vld [vmem:[#allocation2] sm:$0xff]
    %v22 = vld [vmem:[#allocation2 + $0x8] sm:$0xff]
    %v23 = vmax.f32 %v21, 0.0
    %v24 = vmax.f32 %v22, 0.0
    %v25 = vand.u32 2147483647, %v21
    %v26 = vand.u32 2147483647, %v22
    %v27 = vsub.f32 0.0, %v25
    %v28 = vsub.f32 0.0, %v26
    %v29 = vmul.f32 %v27, 1.442695
    %v30 = vpow.pop %v29
    %v31 = vmul.f32 %v28, 1.442695
    %v32 = vpow.pop %v31
    %v33 = vadd.f32 %v30, 1.0
    %v34 = vlog2.pop %v33
    %v35 = vmul.f32 %v34, 0.6931472
    %v36 = vmul.f32 -0.5, %v30
    %v37 = vadd.f32 %v36, 1.0
    %v38 = vmul.f32 %v37, %v30
    %v39 = vand.u32 2147483647, %v30
    %vm40 = vcmp.lt.f32.partialorder %v39, 0.0004427343
    %v41 = vsel %vm40, %v38, %v35
    %v42 = vadd.f32 %v32, 1.0
    %v43 = vlog2.pop %v42
    %v44 = vmul.f32 %v43, 0.6931472
    %v45 = vmul.f32 -0.5, %v32
    %v46 = vadd.f32 %v45, 1.0
    %v47 = vmul.f32 %v46, %v32
    %v48 = vand.u32 2147483647, %v32
    %vm49 = vcmp.lt.f32.partialorder %v48, 0.0004427343
    %v50 = vsel %vm49, %v47, %v44
    %v51 = vadd.f32 %v23, %v41
    %v52 = vadd.f32 %v24, %v50
    %v53 = vsub.f32 %v51, 0.6931472
    %v54 = vsub.f32 %v52, 0.6931472
    %55 = vst [vmem:[#allocation5] sm:$0xff] %v53
    %56 = vst [vmem:[#allocation5 + $0x8] sm:$0xff] %v54
    // Predicated region
    $region10: #{tpu_custom_call.1} parent=1 // pred_check
      _
    $region11: #{tpu_custom_call.1} parent=1 // pred_check_branch
      %58 = sbr.rel (0) target = $region13
    $region12: #{tpu_custom_call.1} parent=1 // pred_region
      %s60 = ssub.s32 256, 256
      %61 = vsyncadd [#allocation4], %s60
      %s63 = sshll.u32 [#allocation5], 4
      %s64 = int_to_ptr.vmem [resolvable:$true] %s63
      %66 = dma.vmem_to_hbm [thread:$0]  %s64, 256, %s1, [#allocation4]
    $region13: #{tpu_custom_call.1} parent=1 // pred_fallthru
      _
    // Predicated region
    $region14: #{tpu_custom_call.1} parent=1 // pred_check
      _
    $region15: #{tpu_custom_call.1} parent=1 // pred_check_branch
      %68 = sbr.rel (0) target = $region17
    $region16: #{tpu_custom_call.1} parent=1 // pred_region
      %69 = dma.done [#allocation4], 256
    $region17: #{tpu_custom_call.1} parent=1 // pred_fallthru
      _
    %70 = vsyncpa [#allocation3], 1
    %71 = vsyncpa [#allocation4], 1

</llo_original>
